<compile_context>
chip_gen: v7x
topology: tpu7x:2x2x1
jax: 0.10.0
libtpu: 0.0.40
codegen_flags: <defaults>
</compile_context>

<pallas_src>
import math

import jax
import jax.numpy as jnp
from jax import lax
from jax.experimental import pallas as pl
from jax.experimental.pallas import tpu as pltpu

# ---- static config (small, consistent with the module) ----
B = 2                 # batch
T = 8                 # sequence length
D = 32                # d_model
NHEAD = 4
DK = D // NHEAD
DFF = 64              # dim_feedforward
EPS = 1e-5            # nn.LayerNorm default
BT = B * T            # token rows per call
HBT = NHEAD * BT      # head-replicated rows
SCALE = 1.0 / math.sqrt(DK)
OUT_LANES = 128       # lane-dense output width (result in lanes 0:D)

# ---- constant-slab row offsets (single (ROWS, 128) f32 operand) ----
R_W = 0                   # rows   0: 32  [wq | wk | wv | wo]          (32, 128)
R_FF1 = R_W + D           # rows  32: 64  wf1                          (32, 64)
R_FF2 = R_FF1 + D         # rows  64:128  wf2                          (64, 32)
R_VEC = R_FF2 + DFF       # rows 128:136  biases / LN gamma,beta       (8, 128)
R_KVM = R_VEC + 8         # rows 136:200  per-head lane selector       (64, 32)
R_ABIAS = R_KVM + HBT     # rows 200:264  additive (head,batch) mask   (64, 64)
ROWS = R_ABIAS + HBT      # 264 rows -> 132 KiB, trivially VMEM-resident


def _layernorm(y, gamma, beta):
    # mean and mean-of-squares are independent reductions (overlap on XLU);
    # var = E[y^2] - mu^2 is numerically fine at these magnitudes/tolerance.
    mu = jnp.mean(y, axis=-1, keepdims=True)
    ms = jnp.mean(y * y, axis=-1, keepdims=True)
    var = ms - mu * mu
    return (y - mu) * lax.rsqrt(var + EPS) * gamma + beta


def encoder_layer_kernel(xr_ref, c_ref, out_ref):
    """One invocation == the whole layer.

    Operands (all VMEM resident, gridless):
      xr_ref : (NHEAD*BT, D) = (64, 32)  activations head-replicated along rows
      c_ref  : (ROWS, 128)               packed constants (see R_* offsets)
      out    : (BT, 128)                 result in lanes 0:D (lane-dense store)
    """
    xr = xr_ref[...]                     # (64, 32) replicated activations
    x = xr[0:BT, :]                      # (16, 32) original rows (residual)
    vec = c_ref[R_VEC:R_VEC + 8, :]      # one vreg of biases / LN params

    # --- fused QKV projection: one (64,32)@(32,96) matmul ---------------------
    qkv = (jnp.dot(xr, c_ref[R_W:R_W + D, 0:3 * D],
                   preferred_element_type=jnp.float32)
           + vec[0:1, 0:3 * D])                                   # (64, 96)

    # Per-head lane selector (precomputed): row block h keeps lanes h*DK..+DK.
    kvm = c_ref[R_KVM:R_KVM + HBT, 0:D]                            # (64, 32)
    q4 = qkv[:, 0:D]                                               # unmasked
    k4 = qkv[:, D:2 * D] * kvm
    v4 = qkv[:, 2 * D:3 * D] * kvm

    # --- all heads & batches in ONE score matmul ------------------------------
    # S[i,j] contracts only over head-h' lanes (k4 masked); the precomputed
    # additive bias (0 / -1e30) kills cross-head and cross-batch blocks.
    s = lax.dot_general(q4, k4, (((1,), (1,)), ((), ())),
                        preferred_element_type=jnp.float32) * SCALE
    s = s + c_ref[R_ABIAS:R_ABIAS + HBT, 0:HBT]                    # (64, 64)
    s = s - jnp.max(s, axis=-1, keepdims=True)
    p = jnp.exp(s)                                                 # masked -> 0.0
    den = jnp.sum(p, axis=-1, keepdims=True)
    r = pl.reciprocal(den, approx=True)                            # EUP slot
    r = r * (2.0 - den * r)                                        # 1 NR step
    p = p * r

    # --- PV and output projection ---------------------------------------------
    o4 = jnp.dot(p, v4, preferred_element_type=jnp.float32)        # (64, 32)
    # Row block h is nonzero only in lanes h*DK..+DK -> summing the 4 row
    # blocks IS the head concatenation along lanes.
    o = o4[0:BT] + o4[BT:2 * BT] + o4[2 * BT:3 * BT] + o4[3 * BT:4 * BT]
    attn = (jnp.dot(o, c_ref[R_W:R_W + D, 3 * D:4 * D],
                    preferred_element_type=jnp.float32)
            + vec[1:2, 0:D])                                       # (16, 32)

    # --- residual + norm1 -------------------------------------------------------
    x1 = _layernorm(x + attn, vec[2:3, 0:D], vec[3:4, 0:D])

    # --- feed-forward (dropout == identity in eval) -----------------------------
    h1 = jnp.maximum(
        jnp.dot(x1, c_ref[R_FF1:R_FF1 + D, 0:DFF],
                preferred_element_type=jnp.float32) + vec[4:5, 0:DFF], 0.0)
    ffo = (jnp.dot(h1, c_ref[R_FF2:R_FF2 + DFF, 0:D],
                   preferred_element_type=jnp.float32)
           + vec[5:6, 0:D])

    # --- residual + norm2 -------------------------------------------------------
    y = _layernorm(x1 + ffo, vec[6:7, 0:D], vec[7:8, 0:D])

    # Lane-dense, unmasked store: result in lanes 0:D, zero padding beyond.
    out_ref[...] = jnp.concatenate(
        [y, jnp.zeros((BT, OUT_LANES - D), jnp.float32)], axis=1)


def pack_params(p):
    """Pack the torch-style parameter dict into ONE (ROWS,128) slab (done once)."""
    C = jnp.zeros((ROWS, 128), jnp.float32)
    # fused projection weights
    C = C.at[R_W:R_W + D, 0 * D:1 * D].set(p["wq"])
    C = C.at[R_W:R_W + D, 1 * D:2 * D].set(p["wk"])
    C = C.at[R_W:R_W + D, 2 * D:3 * D].set(p["wv"])
    C = C.at[R_W:R_W + D, 3 * D:4 * D].set(p["wo"])
    # feed-forward weights
    C = C.at[R_FF1:R_FF1 + D, 0:DFF].set(p["wf1"])
    C = C.at[R_FF2:R_FF2 + DFF, 0:D].set(p["wf2"])
    # biases / LN params (one vreg)
    C = C.at[R_VEC + 0, 0:3 * D].set(
        jnp.concatenate([p["bq"][0], p["bk"][0], p["bv"][0]]))
    C = C.at[R_VEC + 1, 0:D].set(p["bo"][0])
    C = C.at[R_VEC + 2, 0:D].set(p["g1"][0])
    C = C.at[R_VEC + 3, 0:D].set(p["be1"][0])
    C = C.at[R_VEC + 4, 0:DFF].set(p["bf1"][0])
    C = C.at[R_VEC + 5, 0:D].set(p["bf2"][0])
    C = C.at[R_VEC + 6, 0:D].set(p["g2"][0])
    C = C.at[R_VEC + 7, 0:D].set(p["be2"][0])
    # per-head lane selector for K/V rows: row block h keeps lanes h*DK..h*DK+DK
    row = jnp.arange(HBT)
    head = row // BT
    lane_head = jnp.arange(D) // DK
    kvmask = (head[:, None] == lane_head[None, :]).astype(jnp.float32)
    C = C.at[R_KVM:R_KVM + HBT, 0:D].set(kvmask)
    # additive attention mask: 0 where same (head, batch) block, else -1e30
    batch = (row % BT) // T
    same = (head[:, None] == head[None, :]) & (batch[:, None] == batch[None, :])
    abias = jnp.where(same, 0.0, -1e30).astype(jnp.float32)
    C = C.at[R_ABIAS:R_ABIAS + HBT, 0:HBT].set(abias)
    return C


def transformer_encoder_layer(x, consts):
    """x: (B, T, D) float32.  consts: output of pack_params()."""
    x2 = x.reshape(BT, D)                       # batch folded into rows
    xrep = jnp.tile(x2, (NHEAD, 1))             # head replication done in XLA
    vmem = pl.BlockSpec(memory_space=pltpu.MemorySpace.VMEM)
    out = pl.pallas_call(
        encoder_layer_kernel,
        out_shape=jax.ShapeDtypeStruct((BT, OUT_LANES), jnp.float32),
        in_specs=[vmem, vmem],
        out_specs=vmem,
    )(xrep, consts)
    return out[:, :D].reshape(B, T, D)


def init_params(key):
    ks = jax.random.split(key, 8)
    n = lambda k, shape: (0.02 * jax.random.normal(k, shape)).astype(jnp.float32)
    zeros = lambda shape: jnp.zeros(shape, jnp.float32)
    ones = lambda shape: jnp.ones(shape, jnp.float32)
    return dict(
        wq=n(ks[0], (D, D)), bq=zeros((1, D)),
        wk=n(ks[1], (D, D)), bk=zeros((1, D)),
        wv=n(ks[2], (D, D)), bv=zeros((1, D)),
        wo=n(ks[3], (D, D)), bo=zeros((1, D)),
        g1=ones((1, D)), be1=zeros((1, D)),
        wf1=n(ks[4], (D, DFF)), bf1=zeros((1, DFF)),
        wf2=n(ks[5], (DFF, D)), bf2=zeros((1, D)),
        g2=ones((1, D)), be2=zeros((1, D)),
    )


def reference(x, p):
    """Pure-JAX reference mirroring the PyTorch forward (eval mode)."""
    q = x @ p["wq"] + p["bq"]
    k = x @ p["wk"] + p["bk"]
    v = x @ p["wv"] + p["bv"]
    qh = q.reshape(B, T, NHEAD, DK).transpose(0, 2, 1, 3)
    kh = k.reshape(B, T, NHEAD, DK).transpose(0, 2, 1, 3)
    vh = v.reshape(B, T, NHEAD, DK).transpose(0, 2, 1, 3)
    s = jnp.einsum("bhqd,bhkd->bhqk", qh, kh) / math.sqrt(DK)
    a = jax.nn.softmax(s, axis=-1)
    o = jnp.einsum("bhqk,bhkd->bhqd", a, vh).transpose(0, 2, 1, 3).reshape(B, T, D)
    o = o @ p["wo"] + p["bo"]

    def ln(y, g, b):
        mu = jnp.mean(y, -1, keepdims=True)
        var = jnp.mean((y - mu) ** 2, -1, keepdims=True)
        return (y - mu) / jnp.sqrt(var + EPS) * g + b

    x1 = ln(x + o, p["g1"], p["be1"])
    f = jnp.maximum(x1 @ p["wf1"] + p["bf1"], 0.0) @ p["wf2"] + p["bf2"]
    return ln(x1 + f, p["g2"], p["be2"])


if __name__ == "__main__":
    key = jax.random.PRNGKey(0)
    kx, kp = jax.random.split(key)
    x = jax.random.normal(kx, (B, T, D), dtype=jnp.float32)
    params = init_params(kp)
    consts = pack_params(params)          # packed once, outside the kernel call

    out = transformer_encoder_layer(x, consts)
    out = jax.block_until_ready(out)

    ref = reference(x, params)
    assert out.shape == (B, T, D)
    assert jnp.allclose(out, ref, atol=1e-4, rtol=1e-4), "mismatch vs reference"
    print("KERNEL_OK")
</pallas_src>

<mosaic_0001>
module attributes {stable_mosaic.version = 11 : i64} {
  func.func @encoder_layer_kernel(%arg0: memref<64x32xf32, #tpu.memory_space<vmem>>, %arg1: memref<264x128xf32, #tpu.memory_space<vmem>>, %arg2: memref<16x128xf32, #tpu.memory_space<vmem>>) attributes {dimension_semantics = [], scalar_prefetch = 0 : i64, scratch_operands = 0 : i64, tpu.core_type = #tpu.core_type<tc>} {
    %c0 = arith.constant 0 : index
    %c0_0 = arith.constant 0 : index
    %0 = vector.load %arg0[%c0, %c0_0] : memref<64x32xf32, #tpu.memory_space<vmem>>, vector<64x32xf32>
    %1 = vector.extract_strided_slice %0 {offsets = [0, 0], sizes = [16, 32], strides = [1, 1]} : vector<64x32xf32> to vector<16x32xf32>
    %c128 = arith.constant 128 : index
    %c0_1 = arith.constant 0 : index
    %2 = vector.load %arg1[%c128, %c0_1] : memref<264x128xf32, #tpu.memory_space<vmem>>, vector<8x128xf32>
    %c0_2 = arith.constant 0 : index
    %c0_3 = arith.constant 0 : index
    %3 = vector.load %arg1[%c0_2, %c0_3] : memref<264x128xf32, #tpu.memory_space<vmem>>, vector<32x96xf32>
    %cst = arith.constant dense<0.000000e+00> : vector<64x96xf32>
    %4 = tpu.matmul %0, %3, %cst {dimension_numbers = #tpu.dot_dimension_numbers<[1], [0], [0], [1], [0, 0, 1, 1], [], []>} : vector<64x32xf32>, vector<32x96xf32>, vector<64x96xf32> -> vector<64x96xf32>
    %5 = vector.extract_strided_slice %2 {offsets = [0, 0], sizes = [1, 96], strides = [1, 1]} : vector<8x128xf32> to vector<1x96xf32>
    %6 = vector.broadcast %5 : vector<1x96xf32> to vector<64x96xf32>
    %7 = arith.addf %4, %6 : vector<64x96xf32>
    %c136 = arith.constant 136 : index
    %c0_4 = arith.constant 0 : index
    %8 = vector.load %arg1[%c136, %c0_4] : memref<264x128xf32, #tpu.memory_space<vmem>>, vector<64x32xf32>
    %9 = vector.extract_strided_slice %7 {offsets = [0, 0], sizes = [64, 32], strides = [1, 1]} : vector<64x96xf32> to vector<64x32xf32>
    %10 = vector.extract_strided_slice %7 {offsets = [0, 32], sizes = [64, 32], strides = [1, 1]} : vector<64x96xf32> to vector<64x32xf32>
    %11 = arith.mulf %10, %8 : vector<64x32xf32>
    %12 = vector.extract_strided_slice %7 {offsets = [0, 64], sizes = [64, 32], strides = [1, 1]} : vector<64x96xf32> to vector<64x32xf32>
    %13 = arith.mulf %12, %8 : vector<64x32xf32>
    %cst_5 = arith.constant dense<0.000000e+00> : vector<64x64xf32>
    %14 = tpu.matmul %9, %11, %cst_5 {dimension_numbers = #tpu.dot_dimension_numbers<[1], [1], [0], [0], [0, 0, 1, 0], [], []>} : vector<64x32xf32>, vector<64x32xf32>, vector<64x64xf32> -> vector<64x64xf32>
    %cst_6 = arith.constant 0.353553385 : f32
    %15 = vector.broadcast %cst_6 : f32 to vector<64x64xf32>
    %16 = arith.mulf %14, %15 : vector<64x64xf32>
    %c200 = arith.constant 200 : index
    %c0_7 = arith.constant 0 : index
    %17 = vector.load %arg1[%c200, %c0_7] : memref<264x128xf32, #tpu.memory_space<vmem>>, vector<64x64xf32>
    %18 = arith.addf %16, %17 : vector<64x64xf32>
    %cst_8 = arith.constant dense<0xFF800000> : vector<64xf32>
    %19 = vector.multi_reduction <maximumf>, %18, %cst_8 [1] : vector<64x64xf32> to vector<64xf32>
    %20 = vector.shape_cast %19 : vector<64xf32> to vector<64x1xf32>
    %21 = vector.broadcast %20 : vector<64x1xf32> to vector<64x64xf32>
    %22 = arith.subf %18, %21 : vector<64x64xf32>
    %23 = math.exp %22 : vector<64x64xf32>
    %cst_9 = arith.constant dense<0.000000e+00> : vector<64xf32>
    %24 = vector.multi_reduction <add>, %23, %cst_9 [1] : vector<64x64xf32> to vector<64xf32>
    %25 = vector.shape_cast %24 : vector<64xf32> to vector<64x1xf32>
    %26 = tpu.reciprocal %25 {approx = true} : vector<64x1xf32> -> vector<64x1xf32>
    %27 = arith.mulf %25, %26 : vector<64x1xf32>
    %cst_10 = arith.constant 2.000000e+00 : f32
    %28 = vector.broadcast %cst_10 : f32 to vector<64x1xf32>
    %29 = arith.subf %28, %27 : vector<64x1xf32>
    %30 = arith.mulf %26, %29 : vector<64x1xf32>
    %31 = vector.broadcast %30 : vector<64x1xf32> to vector<64x64xf32>
    %32 = arith.mulf %23, %31 : vector<64x64xf32>
    %cst_11 = arith.constant dense<0.000000e+00> : vector<64x32xf32>
    %33 = tpu.matmul %32, %13, %cst_11 {dimension_numbers = #tpu.dot_dimension_numbers<[1], [0], [0], [1], [0, 0, 1, 1], [], []>} : vector<64x64xf32>, vector<64x32xf32>, vector<64x32xf32> -> vector<64x32xf32>
    %34 = vector.extract_strided_slice %33 {offsets = [0, 0], sizes = [16, 32], strides = [1, 1]} : vector<64x32xf32> to vector<16x32xf32>
    %35 = vector.extract_strided_slice %33 {offsets = [16, 0], sizes = [16, 32], strides = [1, 1]} : vector<64x32xf32> to vector<16x32xf32>
    %36 = arith.addf %34, %35 : vector<16x32xf32>
    %37 = vector.extract_strided_slice %33 {offsets = [32, 0], sizes = [16, 32], strides = [1, 1]} : vector<64x32xf32> to vector<16x32xf32>
    %38 = arith.addf %36, %37 : vector<16x32xf32>
    %39 = vector.extract_strided_slice %33 {offsets = [48, 0], sizes = [16, 32], strides = [1, 1]} : vector<64x32xf32> to vector<16x32xf32>
    %40 = arith.addf %38, %39 : vector<16x32xf32>
    %c0_12 = arith.constant 0 : index
    %c96 = arith.constant 96 : index
    %41 = vector.load %arg1[%c0_12, %c96] : memref<264x128xf32, #tpu.memory_space<vmem>>, vector<32x32xf32>
    %cst_13 = arith.constant dense<0.000000e+00> : vector<16x32xf32>
    %42 = tpu.matmul %40, %41, %cst_13 {dimension_numbers = #tpu.dot_dimension_numbers<[1], [0], [0], [1], [0, 0, 1, 1], [], []>} : vector<16x32xf32>, vector<32x32xf32>, vector<16x32xf32> -> vector<16x32xf32>
    %43 = vector.extract_strided_slice %2 {offsets = [1, 0], sizes = [1, 32], strides = [1, 1]} : vector<8x128xf32> to vector<1x32xf32>
    %44 = vector.broadcast %43 : vector<1x32xf32> to vector<16x32xf32>
    %45 = arith.addf %42, %44 : vector<16x32xf32>
    %46 = arith.addf %1, %45 : vector<16x32xf32>
    %47 = vector.extract_strided_slice %2 {offsets = [2, 0], sizes = [1, 32], strides = [1, 1]} : vector<8x128xf32> to vector<1x32xf32>
    %48 = vector.extract_strided_slice %2 {offsets = [3, 0], sizes = [1, 32], strides = [1, 1]} : vector<8x128xf32> to vector<1x32xf32>
    %cst_14 = arith.constant dense<0.000000e+00> : vector<16xf32>
    %49 = vector.multi_reduction <add>, %46, %cst_14 [1] : vector<16x32xf32> to vector<16xf32>
    %50 = vector.shape_cast %49 : vector<16xf32> to vector<16x1xf32>
    %cst_15 = arith.constant 3.200000e+01 : f32
    %51 = vector.broadcast %cst_15 : f32 to vector<16x1xf32>
    %52 = arith.divf %50, %51 : vector<16x1xf32>
    %53 = arith.mulf %46, %46 : vector<16x32xf32>
    %cst_16 = arith.constant dense<0.000000e+00> : vector<16xf32>
    %54 = vector.multi_reduction <add>, %53, %cst_16 [1] : vector<16x32xf32> to vector<16xf32>
    %55 = vector.shape_cast %54 : vector<16xf32> to vector<16x1xf32>
    %cst_17 = arith.constant 3.200000e+01 : f32
    %56 = vector.broadcast %cst_17 : f32 to vector<16x1xf32>
    %57 = arith.divf %55, %56 : vector<16x1xf32>
    %58 = arith.mulf %52, %52 : vector<16x1xf32>
    %59 = arith.subf %57, %58 : vector<16x1xf32>
    %60 = vector.broadcast %52 : vector<16x1xf32> to vector<16x32xf32>
    %61 = arith.subf %46, %60 : vector<16x32xf32>
    %cst_18 = arith.constant 9.99999974E-6 : f32
    %62 = vector.broadcast %cst_18 : f32 to vector<16x1xf32>
    %63 = arith.addf %59, %62 : vector<16x1xf32>
    %64 = math.rsqrt %63 : vector<16x1xf32>
    %65 = vector.broadcast %64 : vector<16x1xf32> to vector<16x32xf32>
    %66 = arith.mulf %61, %65 : vector<16x32xf32>
    %67 = vector.broadcast %47 : vector<1x32xf32> to vector<16x32xf32>
    %68 = arith.mulf %66, %67 : vector<16x32xf32>
    %69 = vector.broadcast %48 : vector<1x32xf32> to vector<16x32xf32>
    %70 = arith.addf %68, %69 : vector<16x32xf32>
    %c32 = arith.constant 32 : index
    %c0_19 = arith.constant 0 : index
    %71 = vector.load %arg1[%c32, %c0_19] : memref<264x128xf32, #tpu.memory_space<vmem>>, vector<32x64xf32>
    %cst_20 = arith.constant dense<0.000000e+00> : vector<16x64xf32>
    %72 = tpu.matmul %70, %71, %cst_20 {dimension_numbers = #tpu.dot_dimension_numbers<[1], [0], [0], [1], [0, 0, 1, 1], [], []>} : vector<16x32xf32>, vector<32x64xf32>, vector<16x64xf32> -> vector<16x64xf32>
    %73 = vector.extract_strided_slice %2 {offsets = [4, 0], sizes = [1, 64], strides = [1, 1]} : vector<8x128xf32> to vector<1x64xf32>
    %74 = vector.broadcast %73 : vector<1x64xf32> to vector<16x64xf32>
    %75 = arith.addf %72, %74 : vector<16x64xf32>
    %cst_21 = arith.constant 0.000000e+00 : f32
    %76 = vector.broadcast %cst_21 : f32 to vector<16x64xf32>
    %77 = arith.maximumf %75, %76 : vector<16x64xf32>
    %c64 = arith.constant 64 : index
    %c0_22 = arith.constant 0 : index
    %78 = vector.load %arg1[%c64, %c0_22] : memref<264x128xf32, #tpu.memory_space<vmem>>, vector<64x32xf32>
    %cst_23 = arith.constant dense<0.000000e+00> : vector<16x32xf32>
    %79 = tpu.matmul %77, %78, %cst_23 {dimension_numbers = #tpu.dot_dimension_numbers<[1], [0], [0], [1], [0, 0, 1, 1], [], []>} : vector<16x64xf32>, vector<64x32xf32>, vector<16x32xf32> -> vector<16x32xf32>
    %80 = vector.extract_strided_slice %2 {offsets = [5, 0], sizes = [1, 32], strides = [1, 1]} : vector<8x128xf32> to vector<1x32xf32>
    %81 = vector.broadcast %80 : vector<1x32xf32> to vector<16x32xf32>
    %82 = arith.addf %79, %81 : vector<16x32xf32>
    %83 = arith.addf %70, %82 : vector<16x32xf32>
    %84 = vector.extract_strided_slice %2 {offsets = [6, 0], sizes = [1, 32], strides = [1, 1]} : vector<8x128xf32> to vector<1x32xf32>
    %85 = vector.extract_strided_slice %2 {offsets = [7, 0], sizes = [1, 32], strides = [1, 1]} : vector<8x128xf32> to vector<1x32xf32>
    %cst_24 = arith.constant dense<0.000000e+00> : vector<16xf32>
    %86 = vector.multi_reduction <add>, %83, %cst_24 [1] : vector<16x32xf32> to vector<16xf32>
    %87 = vector.shape_cast %86 : vector<16xf32> to vector<16x1xf32>
    %cst_25 = arith.constant 3.200000e+01 : f32
    %88 = vector.broadcast %cst_25 : f32 to vector<16x1xf32>
    %89 = arith.divf %87, %88 : vector<16x1xf32>
    %90 = arith.mulf %83, %83 : vector<16x32xf32>
    %cst_26 = arith.constant dense<0.000000e+00> : vector<16xf32>
    %91 = vector.multi_reduction <add>, %90, %cst_26 [1] : vector<16x32xf32> to vector<16xf32>
    %92 = vector.shape_cast %91 : vector<16xf32> to vector<16x1xf32>
    %cst_27 = arith.constant 3.200000e+01 : f32
    %93 = vector.broadcast %cst_27 : f32 to vector<16x1xf32>
    %94 = arith.divf %92, %93 : vector<16x1xf32>
    %95 = arith.mulf %89, %89 : vector<16x1xf32>
    %96 = arith.subf %94, %95 : vector<16x1xf32>
    %97 = vector.broadcast %89 : vector<16x1xf32> to vector<16x32xf32>
    %98 = arith.subf %83, %97 : vector<16x32xf32>
    %cst_28 = arith.constant 9.99999974E-6 : f32
    %99 = vector.broadcast %cst_28 : f32 to vector<16x1xf32>
    %100 = arith.addf %96, %99 : vector<16x1xf32>
    %101 = math.rsqrt %100 : vector<16x1xf32>
    %102 = vector.broadcast %101 : vector<16x1xf32> to vector<16x32xf32>
    %103 = arith.mulf %98, %102 : vector<16x32xf32>
    %104 = vector.broadcast %84 : vector<1x32xf32> to vector<16x32xf32>
    %105 = arith.mulf %103, %104 : vector<16x32xf32>
    %106 = vector.broadcast %85 : vector<1x32xf32> to vector<16x32xf32>
    %107 = arith.addf %105, %106 : vector<16x32xf32>
    %cst_29 = arith.constant 0.000000e+00 : f32
    %108 = vector.broadcast %cst_29 : f32 to vector<16x96xf32>
    %109 = tpu.concatenate %107, %108 in 1 : vector<16x32xf32>, vector<16x96xf32> -> vector<16x128xf32>
    %c0_30 = arith.constant 0 : index
    %c0_31 = arith.constant 0 : index
    %110 = vector.load %arg2[%c0_30, %c0_31] : memref<16x128xf32, #tpu.memory_space<vmem>>, vector<16x128xf32>
    tpu.vector_store %arg2[%c0_30, %c0_31], %109 {strides = array<i32>} : memref<16x128xf32, #tpu.memory_space<vmem>>, vector<16x128xf32>,
    return
  }
}

</mosaic_0001>

<llo_original>
// kernel: tpu_custom_call.1
$region0: #{tpu_custom_call.1}
  #allocation0 [shape = 'u32[]', space=smem, size = 0x4, offset = 0x4, fixed_abs, tag = 'smem constant byte address 0x4 - core index']
  #allocation1 [shape = 'u32[144,128]{1,0:T(1,128)}', space=vmem, size = 0x12000, scoped, tag = 'internal scratch']
  %s0 = inlined_call_operand.vmem [shape: f32[64,32], index: 0, kind: input, shape index: {}]
  %s1 = inlined_call_operand.hbm [shape: f32[264,128], index: 1, kind: input, shape index: {}]
  %s2 = inlined_call_operand.hbm [shape: f32[16,128], index: 2, kind: output, shape index: {}]
  %s3 = sld [smem:[#allocation0]]
  $region22: #{tpu_custom_call.1} parent=0
    _
  %s5 = ssub.s32 1, %s3
  %s6 = scalar_select 0, %s5, %s3
  $region1: #{tpu_custom_call.1} parent=0
    #allocation2 [shape = 'u8[135168]{0}', space=vmem, size = 0x21000, scoped, tag = 'input window, operand 1, single buffered']
    #allocation3 [shape = 's32[1]{0}', space=sflag, size = 0x4, scoped, tag = 'scoped memory for tpu_custom_call.1']
    #allocation4 [shape = 's32[1]{0}', space=sflag, size = 0x4, scoped, tag = 'scoped memory for tpu_custom_call.1']
    #allocation5 [shape = 'u8[8192]{0}', space=vmem, size = 0x2000, scoped, tag = 'output window, operand 0, single buffered']
    %7 = vsyncpa [#allocation3], 0
    %8 = vsyncpa [#allocation4], 0
    // Predicated region
    $region2: #{tpu_custom_call.1} parent=1 // pred_check
      _
    $region3: #{tpu_custom_call.1} parent=1 // pred_check_branch
      %10 = sbr.rel (0) target = $region5
    $region4: #{tpu_custom_call.1} parent=1 // pred_region
      _
    $region5: #{tpu_custom_call.1} parent=1 // pred_fallthru
      _
    // Predicated region
    $region6: #{tpu_custom_call.1} parent=1 // pred_check
      _
    $region7: #{tpu_custom_call.1} parent=1 // pred_check_branch
      %12 = sbr.rel (0) target = $region9
    $region8: #{tpu_custom_call.1} parent=1 // pred_region
      %s14 = ssub.s32 4224, 4224
      %15 = vsyncadd [#allocation3], %s14
      %s16 = sshll.u32 [#allocation2], 4
      %s17 = int_to_ptr.vmem [resolvable:$true] %s16
      %22 = dma.hbm_to_vmem [thread:$0]  %s1, 4224, %s17, [#allocation3], 128, 128, 8
    $region9: #{tpu_custom_call.1} parent=1 // pred_fallthru
      _
    // Predicated region
    $region10: #{tpu_custom_call.1} parent=1 // pred_check
      _
    $region11: #{tpu_custom_call.1} parent=1 // pred_check_branch
      %24 = sbr.rel (0) target = $region13
    $region12: #{tpu_custom_call.1} parent=1 // pred_region
      %25 = dma.done [#allocation3], 4224
    $region13: #{tpu_custom_call.1} parent=1 // pred_fallthru
      _
    %v26 = vld [vmem:[%s0] sm:$0xff]
    %v27 = vld [vmem:[%s0 + $0x8] sm:$0xff]
    %v28 = vld [vmem:[%s0 + $0x10] sm:$0xff]
    %v29 = vld [vmem:[%s0 + $0x18] sm:$0xff]
    %v30 = vld [vmem:[%s0 + $0x20] sm:$0xff]
    %v31 = vld [vmem:[%s0 + $0x28] sm:$0xff]
    %v32 = vld [vmem:[%s0 + $0x30] sm:$0xff]
    %v33 = vld [vmem:[%s0 + $0x38] sm:$0xff]
    %v34 = vld [vmem:[#allocation2 + $0x80] sm:$0xff]
    %v35 = vld [vmem:[#allocation2] sm:$0xff]
    %v36 = vld [vmem:[#allocation2 + $0x8] sm:$0xff]
    %v37 = vld [vmem:[#allocation2 + $0x10] sm:$0xff]
    %v38 = vld [vmem:[#allocation2 + $0x18] sm:$0xff]
    %v39 = vlaneseq
    %v40 = vshrl.u32 %v39, 7
    %v41 = vsub.s32 0, %v40
    %v42 = vrot.slane %v34, %v41
    %vm43 = vcmask 261120
    %v45 = vsel %vm43, %v26, 0
    %v48 = vsel %vm43, %v27, 0
    %v51 = vsel %vm43, %v28, 0
    %v54 = vsel %vm43, %v29, 0
    %v57 = vsel %vm43, %v30, 0
    %v60 = vsel %vm43, %v31, 0
    %v63 = vsel %vm43, %v32, 0
    %v66 = vsel %vm43, %v33, 0
    %68 = vmatprep.subr.mxu0 0.0
    %69 = vmatpush1.msra.mxu0 %v35
    %70 = vmatprep.subr.mxu0 0.0
    %71 = vmatpush1.msra.mxu0 %v36
    %72 = vmatprep.subr.mxu0 0.0
    %73 = vmatpush1.msra.mxu0 %v37
    %74 = vmatprep.subr.mxu0 0.0
    %75 = vmatpush1.msra.mxu0 %v38
    %76 = vmatprep.subr.mxu0 0.0
    %77 = vmatpush1.msra.mxu0 0.0
    %78 = vmatprep.subr.mxu0 0.0
    %79 = vmatpush1.msra.mxu0 0.0
    %80 = vmatprep.subr.mxu0 0.0
    %81 = vmatpush1.msra.mxu0 0.0
    %82 = vmatprep.subr.mxu0 0.0
    %83 = vmatpush1.msra.mxu0 0.0
    %84 = vmatprep.subr.mxu0 0.0
    %85 = vmatpush1.msra.mxu0 0.0
    %86 = vmatprep.subr.mxu0 0.0
    %87 = vmatpush1.msra.mxu0 0.0
    %88 = vmatprep.subr.mxu0 0.0
    %89 = vmatpush1.msra.mxu0 0.0
    %90 = vmatprep.subr.mxu0 0.0
    %91 = vmatpush1.msra.mxu0 0.0
    %92 = vmatprep.subr.mxu0 0.0
    %93 = vmatpush1.msra.mxu0 0.0
    %94 = vmatprep.subr.mxu0 0.0
    %95 = vmatpush1.msra.mxu0 0.0
    %96 = vmatprep.subr.mxu0 0.0
    %97 = vmatpush1.msra.mxu0 0.0
    %98 = vmatprep.subr.mxu0 0.0
    %99 = vmatpush1.msra.mxu0 0.0
    %100 = vmatprep.subr.mxu0 0.0
    %101 = vmatpush1.msra.mxu0 0.0
    %102 = vmatprep.subr.mxu0 0.0
    %103 = vmatpush1.msra.mxu0 0.0
    %104 = vmatprep.subr.mxu0 0.0
    %105 = vmatpush1.msra.mxu0 0.0
    %106 = vmatprep.subr.mxu0 0.0
    %107 = vmatpush1.msra.mxu0 0.0
    %108 = vmatprep.subr.mxu0 0.0
    %109 = vmatpush1.msra.mxu0 0.0
    %110 = vmatprep.subr.mxu0 0.0
    %111 = vmatpush1.msra.mxu0 0.0
    %112 = vmatprep.subr.mxu0 0.0
    %113 = vmatpush1.msra.mxu0 0.0
    %114 = vmatprep.subr.mxu0 0.0
    %115 = vmatpush1.msra.mxu0 0.0
    %116 = vmatprep.subr.mxu0 0.0
    %117 = vmatpush1.msra.mxu0 0.0
    %118 = vmatprep.subr.mxu0 0.0
    %119 = vmatpush1.msra.mxu0 0.0
    %120 = vmatprep.subr.mxu0 0.0
    %121 = vmatpush1.msra.mxu0 0.0
    %122 = vmatprep.subr.mxu0 0.0
    %123 = vmatpush1.msra.mxu0 0.0
    %124 = vmatprep.subr.mxu0 0.0
    %125 = vmatpush1.msra.mxu0 0.0
    %126 = vmatprep.subr.mxu0 0.0
    %127 = vmatpush1.msra.mxu0 0.0
    %128 = vmatprep.subr.mxu0 0.0
    %129 = vmatpush1.msra.mxu0 0.0
    %130 = vmatprep.subr.mxu0 0.0
    %131 = vmatpush1.msra.mxu0 0.0
    %132 = vmatprep.mubr.f32.mxu0 0.0
    %133 = vmatmul.mubr.f32.gmra.mrb[0].mxu0 %v45
    %v134 = vpop.f32.mrb[0].mxu0
    %v135 = vadd.f32 %v42, %v134
    %v136 = vpop.f32.mrb[0].mxu0
    %137 = vmatprep.mubr.f32.mxu0 0.0
    %138 = vmatmul.mubr.f32.gmra.mrb[0].mxu0 %v48
    %v139 = vpop.f32.mrb[0].mxu0
    %v140 = vadd.f32 %v42, %v139
    %v141 = vpop.f32.mrb[0].mxu0
    %142 = vmatprep.mubr.f32.mxu0 0.0
    %143 = vmatmul.mubr.f32.gmra.mrb[0].mxu0 %v51
    %v144 = vpop.f32.mrb[0].mxu0
    %v145 = vadd.f32 %v42, %v144
    %v146 = vpop.f32.mrb[0].mxu0
    %147 = vmatprep.mubr.f32.mxu0 0.0
    %148 = vmatmul.mubr.f32.gmra.mrb[0].mxu0 %v54
    %v149 = vpop.f32.mrb[0].mxu0
    %v150 = vadd.f32 %v42, %v149
    %v151 = vpop.f32.mrb[0].mxu0
    %152 = vmatprep.mubr.f32.mxu0 0.0
    %153 = vmatmul.mubr.f32.gmra.mrb[0].mxu0 %v57
    %v154 = vpop.f32.mrb[0].mxu0
    %v155 = vadd.f32 %v42, %v154
    %v156 = vpop.f32.mrb[0].mxu0
    %157 = vmatprep.mubr.f32.mxu0 0.0
    %158 = vmatmul.mubr.f32.gmra.mrb[0].mxu0 %v60
    %v159 = vpop.f32.mrb[0].mxu0
    %v160 = vadd.f32 %v42, %v159
    %v161 = vpop.f32.mrb[0].mxu0
    %162 = vmatprep.mubr.f32.mxu0 0.0
    %163 = vmatmul.mubr.f32.gmra.mrb[0].mxu0 %v63
    %v164 = vpop.f32.mrb[0].mxu0
    %v165 = vadd.f32 %v42, %v164
    %v166 = vpop.f32.mrb[0].mxu0
    %167 = vmatprep.mubr.f32.mxu0 0.0
    %168 = vmatmul.mubr.f32.gmra.mrb[0].mxu0 %v66
    %v169 = vpop.f32.mrb[0].mxu0
    %v170 = vadd.f32 %v42, %v169
    %v171 = vpop.f32.mrb[0].mxu0
    %172 = vdwg.mxu0
    %v173 = vld [vmem:[#allocation2 + $0x88] sm:$0xff]
    %v174 = vld [vmem:[#allocation2 + $0x90] sm:$0xff]
    %v175 = vld [vmem:[#allocation2 + $0x98] sm:$0xff]
    %v176 = vld [vmem:[#allocation2 + $0xa0] sm:$0xff]
    %v177 = vld [vmem:[#allocation2 + $0xa8] sm:$0xff]
    %v178 = vld [vmem:[#allocation2 + $0xb0] sm:$0xff]
    %v179 = vld [vmem:[#allocation2 + $0xb8] sm:$0xff]
    %v180 = vld [vmem:[#allocation2 + $0xc0] sm:$0xff]
    %189 = vrot.lane.b32.xlu0 %v173, 32
    %v190 = vpop.permute.xlu0 %189
    %191 = vrot.lane.b32.xlu0 %v174, 32
    %v192 = vpop.permute.xlu0 %191
    %193 = vrot.lane.b32.xlu0 %v175, 32
    %v194 = vpop.permute.xlu0 %193
    %195 = vrot.lane.b32.xlu0 %v176, 32
    %v196 = vpop.permute.xlu0 %195
    %197 = vrot.lane.b32.xlu0 %v177, 32
    %v198 = vpop.permute.xlu0 %197
    %199 = vrot.lane.b32.xlu0 %v178, 32
    %v200 = vpop.permute.xlu0 %199
    %201 = vrot.lane.b32.xlu0 %v179, 32
    %v202 = vpop.permute.xlu0 %201
    %203 = vrot.lane.b32.xlu0 %v180, 32
    %v204 = vpop.permute.xlu0 %203
    %v213 = vmul.f32 %v135, %v190
    %v214 = vmul.f32 %v140, %v192
    %v215 = vmul.f32 %v145, %v194
    %v216 = vmul.f32 %v150, %v196
    %v217 = vmul.f32 %v155, %v198
    %v218 = vmul.f32 %v160, %v200
    %v219 = vmul.f32 %v165, %v202
    %v220 = vmul.f32 %v170, %v204
    %221 = vrot.lane.b32.xlu0 %v173, 64
    %v222 = vpop.permute.xlu0 %221
    %223 = vrot.lane.b32.xlu0 %v174, 64
    %v224 = vpop.permute.xlu0 %223
    %225 = vrot.lane.b32.xlu0 %v175, 64
    %v226 = vpop.permute.xlu0 %225
    %227 = vrot.lane.b32.xlu0 %v176, 64
    %v228 = vpop.permute.xlu0 %227
    %229 = vrot.lane.b32.xlu0 %v177, 64
    %v230 = vpop.permute.xlu0 %229
    %231 = vrot.lane.b32.xlu0 %v178, 64
    %v232 = vpop.permute.xlu0 %231
    %233 = vrot.lane.b32.xlu0 %v179, 64
    %v234 = vpop.permute.xlu0 %233
    %235 = vrot.lane.b32.xlu0 %v180, 64
    %v236 = vpop.permute.xlu0 %235
    %v245 = vmul.f32 %v135, %v222
    %v246 = vmul.f32 %v140, %v224
    %v247 = vmul.f32 %v145, %v226
    %v248 = vmul.f32 %v150, %v228
    %v249 = vmul.f32 %v155, %v230
    %v250 = vmul.f32 %v160, %v232
    %v251 = vmul.f32 %v165, %v234
    %v252 = vmul.f32 %v170, %v236
    %261 = vrot.lane.b32.xlu0 %v213, 96
    %v262 = vpop.permute.xlu0 %261
    %263 = vrot.lane.b32.xlu0 %v214, 96
    %v264 = vpop.permute.xlu0 %263
    %265 = vrot.lane.b32.xlu0 %v215, 96
    %v266 = vpop.permute.xlu0 %265
    %267 = vrot.lane.b32.xlu0 %v216, 96
    %v268 = vpop.permute.xlu0 %267
    %269 = vrot.lane.b32.xlu0 %v217, 96
    %v270 = vpop.permute.xlu0 %269
    %271 = vrot.lane.b32.xlu0 %v218, 96
    %v272 = vpop.permute.xlu0 %271
    %273 = vrot.lane.b32.xlu0 %v219, 96
    %v274 = vpop.permute.xlu0 %273
    %275 = vrot.lane.b32.xlu0 %v220, 96
    %v276 = vpop.permute.xlu0 %275
    %v278 = vsel %vm43, %v135, 0
    %v281 = vsel %vm43, %v140, 0
    %v284 = vsel %vm43, %v145, 0
    %v287 = vsel %vm43, %v150, 0
    %v290 = vsel %vm43, %v155, 0
    %v293 = vsel %vm43, %v160, 0
    %v296 = vsel %vm43, %v165, 0
    %v299 = vsel %vm43, %v170, 0
    %v301 = vsel %vm43, %v262, 0
    %v303 = vsel %vm43, %v264, 0
    %v305 = vsel %vm43, %v266, 0
    %v307 = vsel %vm43, %v268, 0
    %v309 = vsel %vm43, %v270, 0
    %v311 = vsel %vm43, %v272, 0
    %v313 = vsel %vm43, %v274, 0
    %v315 = vsel %vm43, %v276, 0
    %317 = vmatprep.subr.mxu0 0.0
    %318 = vmatpush1.xpose.msra.mxu0 %v301
    %319 = vmatprep.subr.mxu0 0.0
    %320 = vmatpush1.xpose.msra.mxu0 %v303
    %321 = vmatprep.subr.mxu0 0.0
    %322 = vmatpush1.xpose.msra.mxu0 %v305
    %323 = vmatprep.subr.mxu0 0.0
    %324 = vmatpush1.xpose.msra.mxu0 %v307
    %325 = vmatprep.subr.mxu0 0.0
    %326 = vmatpush1.xpose.msra.mxu0 %v309
    %327 = vmatprep.subr.mxu0 0.0
    %328 = vmatpush1.xpose.msra.mxu0 %v311
    %329 = vmatprep.subr.mxu0 0.0
    %330 = vmatpush1.xpose.msra.mxu0 %v313
    %331 = vmatprep.subr.mxu0 0.0
    %332 = vmatpush1.xpose.msra.mxu0 %v315
    %333 = vmatprep.subr.mxu0 0.0
    %334 = vmatpush1.xpose.msra.mxu0 0.0
    %335 = vmatprep.subr.mxu0 0.0
    %336 = vmatpush1.xpose.msra.mxu0 0.0
    %337 = vmatprep.subr.mxu0 0.0
    %338 = vmatpush1.xpose.msra.mxu0 0.0
    %339 = vmatprep.subr.mxu0 0.0
    %340 = vmatpush1.xpose.msra.mxu0 0.0
    %341 = vmatprep.subr.mxu0 0.0
    %342 = vmatpush1.xpose.msra.mxu0 0.0
    %343 = vmatprep.subr.mxu0 0.0
    %344 = vmatpush1.xpose.msra.mxu0 0.0
    %345 = vmatprep.subr.mxu0 0.0
    %346 = vmatpush1.xpose.msra.mxu0 0.0
    %347 = vmatprep.subr.mxu0 0.0
    %348 = vmatpush1.xpose.msra.mxu0 0.0
    %349 = vmatprep.subr.mxu0 0.0
    %350 = vmatpush1.xpose.msra.mxu0 0.0
    %351 = vmatprep.subr.mxu0 0.0
    %352 = vmatpush1.xpose.msra.mxu0 0.0
    %353 = vmatprep.subr.mxu0 0.0
    %354 = vmatpush1.xpose.msra.mxu0 0.0
    %355 = vmatprep.subr.mxu0 0.0
    %356 = vmatpush1.xpose.msra.mxu0 0.0
    %357 = vmatprep.subr.mxu0 0.0
    %358 = vmatpush1.xpose.msra.mxu0 0.0
    %359 = vmatprep.subr.mxu0 0.0
    %360 = vmatpush1.xpose.msra.mxu0 0.0
    %361 = vmatprep.subr.mxu0 0.0
    %362 = vmatpush1.xpose.msra.mxu0 0.0
    %363 = vmatprep.subr.mxu0 0.0
    %364 = vmatpush1.xpose.msra.mxu0 0.0
    %365 = vmatprep.subr.mxu0 0.0
    %366 = vmatpush1.xpose.msra.mxu0 0.0
    %367 = vmatprep.subr.mxu0 0.0
    %368 = vmatpush1.xpose.msra.mxu0 0.0
    %369 = vmatprep.subr.mxu0 0.0
    %370 = vmatpush1.xpose.msra.mxu0 0.0
    %371 = vmatprep.subr.mxu0 0.0
    %372 = vmatpush1.xpose.msra.mxu0 0.0
    %373 = vmatprep.subr.mxu0 0.0
    %374 = vmatpush1.xpose.msra.mxu0 0.0
    %375 = vmatprep.subr.mxu0 0.0
    %376 = vmatpush1.xpose.msra.mxu0 0.0
    %377 = vmatprep.subr.mxu0 0.0
    %378 = vmatpush1.xpose.msra.mxu0 0.0
    %379 = vmatprep.subr.mxu0 0.0
    %380 = vmatpush1.xpose.msra.mxu0 0.0
    %381 = vmatprep.mubr.f32.mxu0 0.0
    %382 = vmatmul.mubr.f32.gmra.mrb[0].mxu0 %v278
    %v383 = vpop.f32.mrb[0].mxu0
    %v384 = vadd.f32 0.0, %v383
    %v385 = vpop.f32.mrb[0].mxu0
    %386 = vmatprep.mubr.f32.mxu0 0.0
    %387 = vmatmul.mubr.f32.gmra.mrb[0].mxu0 %v281
    %v388 = vpop.f32.mrb[0].mxu0
    %v389 = vadd.f32 0.0, %v388
    %v390 = vpop.f32.mrb[0].mxu0
    %391 = vmatprep.mubr.f32.mxu0 0.0
    %392 = vmatmul.mubr.f32.gmra.mrb[0].mxu0 %v284
    %v393 = vpop.f32.mrb[0].mxu0
    %v394 = vadd.f32 0.0, %v393
    %v395 = vpop.f32.mrb[0].mxu0
    %396 = vmatprep.mubr.f32.mxu0 0.0
    %397 = vmatmul.mubr.f32.gmra.mrb[0].mxu0 %v287
    %v398 = vpop.f32.mrb[0].mxu0
    %v399 = vadd.f32 0.0, %v398
    %v400 = vpop.f32.mrb[0].mxu0
    %401 = vmatprep.mubr.f32.mxu0 0.0
    %402 = vmatmul.mubr.f32.gmra.mrb[0].mxu0 %v290
    %v403 = vpop.f32.mrb[0].mxu0
    %v404 = vadd.f32 0.0, %v403
    %v405 = vpop.f32.mrb[0].mxu0
    %406 = vmatprep.mubr.f32.mxu0 0.0
    %407 = vmatmul.mubr.f32.gmra.mrb[0].mxu0 %v293
    %v408 = vpop.f32.mrb[0].mxu0
    %v409 = vadd.f32 0.0, %v408
    %v410 = vpop.f32.mrb[0].mxu0
    %411 = vmatprep.mubr.f32.mxu0 0.0
    %412 = vmatmul.mubr.f32.gmra.mrb[0].mxu0 %v296
    %v413 = vpop.f32.mrb[0].mxu0
    %v414 = vadd.f32 0.0, %v413
    %v415 = vpop.f32.mrb[0].mxu0
    %416 = vmatprep.mubr.f32.mxu0 0.0
    %417 = vmatmul.mubr.f32.gmra.mrb[0].mxu0 %v299
    %v418 = vpop.f32.mrb[0].mxu0
    %v419 = vadd.f32 0.0, %v418
    %v420 = vpop.f32.mrb[0].mxu0
    %421 = vdwg.mxu0
    %v422 = vmul.f32 %v384, 0.35355338
    %v423 = vmul.f32 %v389, 0.35355338
    %v424 = vmul.f32 %v394, 0.35355338
    %v425 = vmul.f32 %v399, 0.35355338
    %v426 = vmul.f32 %v404, 0.35355338
    %v427 = vmul.f32 %v409, 0.35355338
    %v428 = vmul.f32 %v414, 0.35355338
    %v429 = vmul.f32 %v419, 0.35355338
    %v430 = vld [vmem:[#allocation2 + $0xc8] sm:$0xff]
    %v431 = vld [vmem:[#allocation2 + $0xd0] sm:$0xff]
    %v432 = vld [vmem:[#allocation2 + $0xd8] sm:$0xff]
    %v433 = vld [vmem:[#allocation2 + $0xe0] sm:$0xff]
    %v434 = vld [vmem:[#allocation2 + $0xe8] sm:$0xff]
    %v435 = vld [vmem:[#allocation2 + $0xf0] sm:$0xff]
    %v436 = vld [vmem:[#allocation2 + $0xf8] sm:$0xff]
    %v437 = vld [vmem:[#allocation2 + $0x100] sm:$0xff]
    %v438 = vadd.f32 %v422, %v430
    %v439 = vadd.f32 %v423, %v431
    %v440 = vadd.f32 %v424, %v432
    %v441 = vadd.f32 %v425, %v433
    %v442 = vadd.f32 %v426, %v434
    %v443 = vadd.f32 %v427, %v435
    %v444 = vadd.f32 %v428, %v436
    %v445 = vadd.f32 %v429, %v437
    %vm446 = vcmask 523264
    %v447 = vsel %vm446, %v438, -inf
    %448 = vmax.xlane.f32.xlu0 %v447
    %v449 = vpop.xlane.xlu0 %448
    %v450 = vsel %vm446, %v439, -inf
    %451 = vmax.xlane.f32.xlu0 %v450
    %v452 = vpop.xlane.xlu0 %451
    %v453 = vsel %vm446, %v440, -inf
    %454 = vmax.xlane.f32.xlu0 %v453
    %v455 = vpop.xlane.xlu0 %454
    %v456 = vsel %vm446, %v441, -inf
    %457 = vmax.xlane.f32.xlu0 %v456
    %v458 = vpop.xlane.xlu0 %457
    %v459 = vsel %vm446, %v442, -inf
    %460 = vmax.xlane.f32.xlu0 %v459
    %v461 = vpop.xlane.xlu0 %460
    %v462 = vsel %vm446, %v443, -inf
    %463 = vmax.xlane.f32.xlu0 %v462
    %v464 = vpop.xlane.xlu0 %463
    %v465 = vsel %vm446, %v444, -inf
    %466 = vmax.xlane.f32.xlu0 %v465
    %v467 = vpop.xlane.xlu0 %466
    %v468 = vsel %vm446, %v445, -inf
    %469 = vmax.xlane.f32.xlu0 %v468
    %v470 = vpop.xlane.xlu0 %469
    %v471 = vsub.f32 %v438, %v449
    %v472 = vsub.f32 %v439, %v452
    %v473 = vsub.f32 %v440, %v455
    %v474 = vsub.f32 %v441, %v458
    %v475 = vsub.f32 %v442, %v461
    %v476 = vsub.f32 %v443, %v464
    %v477 = vsub.f32 %v444, %v467
    %v478 = vsub.f32 %v445, %v470
    %v479 = vmul.f32 %v471, 1.442695
    %v480 = vpow.pop %v479
    %v481 = vmul.f32 %v472, 1.442695
    %v482 = vpow.pop %v481
    %v483 = vmul.f32 %v473, 1.442695
    %v484 = vpow.pop %v483
    %v485 = vmul.f32 %v474, 1.442695
    %v486 = vpow.pop %v485
    %v487 = vmul.f32 %v475, 1.442695
    %v488 = vpow.pop %v487
    %v489 = vmul.f32 %v476, 1.442695
    %v490 = vpow.pop %v489
    %v491 = vmul.f32 %v477, 1.442695
    %v492 = vpow.pop %v491
    %v493 = vmul.f32 %v478, 1.442695
    %v494 = vpow.pop %v493
    %v495 = vsel %vm446, %v480, 0.0
    %496 = vadd.xlane.f32.xlu0 %v495
    %v497 = vpop.xlane.xlu0 %496
    %v498 = vsel %vm446, %v482, 0.0
    %499 = vadd.xlane.f32.xlu0 %v498
    %v500 = vpop.xlane.xlu0 %499
    %v501 = vsel %vm446, %v484, 0.0
    %502 = vadd.xlane.f32.xlu0 %v501
    %v503 = vpop.xlane.xlu0 %502
    %v504 = vsel %vm446, %v486, 0.0
    %505 = vadd.xlane.f32.xlu0 %v504
    %v506 = vpop.xlane.xlu0 %505
    %v507 = vsel %vm446, %v488, 0.0
    %508 = vadd.xlane.f32.xlu0 %v507
    %v509 = vpop.xlane.xlu0 %508
    %v510 = vsel %vm446, %v490, 0.0
    %511 = vadd.xlane.f32.xlu0 %v510
    %v512 = vpop.xlane.xlu0 %511
    %v513 = vsel %vm446, %v492, 0.0
    %514 = vadd.xlane.f32.xlu0 %v513
    %v515 = vpop.xlane.xlu0 %514
    %v516 = vsel %vm446, %v494, 0.0
    %517 = vadd.xlane.f32.xlu0 %v516
    %v518 = vpop.xlane.xlu0 %517
    %v519 = vrcp.pop %v497
    %v520 = vrcp.pop %v500
    %v521 = vrcp.pop %v503
    %v522 = vrcp.pop %v506
    %v523 = vrcp.pop %v509
    %v524 = vrcp.pop %v512
    %v525 = vrcp.pop %v515
    %v526 = vrcp.pop %v518
    %v527 = vmul.f32 %v497, %v519
    %v528 = vmul.f32 %v500, %v520
    %v529 = vmul.f32 %v503, %v521
    %v530 = vmul.f32 %v506, %v522
    %v531 = vmul.f32 %v509, %v523
    %v532 = vmul.f32 %v512, %v524
    %v533 = vmul.f32 %v515, %v525
    %v534 = vmul.f32 %v518, %v526
    %v535 = vsub.f32 2.0, %v527
    %v536 = vsub.f32 2.0, %v528
    %v537 = vsub.f32 2.0, %v529
    %v538 = vsub.f32 2.0, %v530
    %v539 = vsub.f32 2.0, %v531
    %v540 = vsub.f32 2.0, %v532
    %v541 = vsub.f32 2.0, %v533
    %v542 = vsub.f32 2.0, %v534
    %v543 = vmul.f32 %v519, %v535
    %v544 = vmul.f32 %v520, %v536
    %v545 = vmul.f32 %v521, %v537
    %v546 = vmul.f32 %v522, %v538
    %v547 = vmul.f32 %v523, %v539
    %v548 = vmul.f32 %v524, %v540
    %v549 = vmul.f32 %v525, %v541
    %v550 = vmul.f32 %v526, %v542
    %v551 = vmul.f32 %v480, %v543
    %v552 = vmul.f32 %v482, %v544
    %v553 = vmul.f32 %v484, %v545
    %v554 = vmul.f32 %v486, %v546
    %v555 = vmul.f32 %v488, %v547
    %v556 = vmul.f32 %v490, %v548
    %v557 = vmul.f32 %v492, %v549
    %v558 = vmul.f32 %v494, %v550
    %567 = vrot.lane.b32.xlu0 %v245, 64
    %v568 = vpop.permute.xlu0 %567
    %569 = vrot.lane.b32.xlu0 %v246, 64
    %v570 = vpop.permute.xlu0 %569
    %571 = vrot.lane.b32.xlu0 %v247, 64
    %v572 = vpop.permute.xlu0 %571
    %573 = vrot.lane.b32.xlu0 %v248, 64
    %v574 = vpop.permute.xlu0 %573
    %575 = vrot.lane.b32.xlu0 %v249, 64
    %v576 = vpop.permute.xlu0 %575
    %577 = vrot.lane.b32.xlu0 %v250, 64
    %v578 = vpop.permute.xlu0 %577
    %579 = vrot.lane.b32.xlu0 %v251, 64
    %v580 = vpop.permute.xlu0 %579
    %581 = vrot.lane.b32.xlu0 %v252, 64
    %v582 = vpop.permute.xlu0 %581
    %v592 = vsel %vm446, %v551, 0
    %v595 = vsel %vm446, %v552, 0
    %v598 = vsel %vm446, %v553, 0
    %v601 = vsel %vm446, %v554, 0
    %v604 = vsel %vm446, %v555, 0
    %v607 = vsel %vm446, %v556, 0
    %v610 = vsel %vm446, %v557, 0
    %v613 = vsel %vm446, %v558, 0
    %615 = vmatprep.subr.mxu0 0.0
    %616 = vmatpush1.msra.mxu0 %v568
    %617 = vmatprep.subr.mxu0 0.0
    %618 = vmatpush1.msra.mxu0 %v570
    %619 = vmatprep.subr.mxu0 0.0
    %620 = vmatpush1.msra.mxu0 %v572
    %621 = vmatprep.subr.mxu0 0.0
    %622 = vmatpush1.msra.mxu0 %v574
    %623 = vmatprep.subr.mxu0 0.0
    %624 = vmatpush1.msra.mxu0 %v576
    %625 = vmatprep.subr.mxu0 0.0
    %626 = vmatpush1.msra.mxu0 %v578
    %627 = vmatprep.subr.mxu0 0.0
    %628 = vmatpush1.msra.mxu0 %v580
    %629 = vmatprep.subr.mxu0 0.0
    %630 = vmatpush1.msra.mxu0 %v582
    %631 = vmatprep.subr.mxu0 0.0
    %632 = vmatpush1.msra.mxu0 0.0
    %633 = vmatprep.subr.mxu0 0.0
    %634 = vmatpush1.msra.mxu0 0.0
    %635 = vmatprep.subr.mxu0 0.0
    %636 = vmatpush1.msra.mxu0 0.0
    %637 = vmatprep.subr.mxu0 0.0
    %638 = vmatpush1.msra.mxu0 0.0
    %639 = vmatprep.subr.mxu0 0.0
    %640 = vmatpush1.msra.mxu0 0.0
    %641 = vmatprep.subr.mxu0 0.0
    %642 = vmatpush1.msra.mxu0 0.0
    %643 = vmatprep.subr.mxu0 0.0
    %644 = vmatpush1.msra.mxu0 0.0
    %645 = vmatprep.subr.mxu0 0.0
    %646 = vmatpush1.msra.mxu0 0.0
    %647 = vmatprep.subr.mxu0 0.0
    %648 = vmatpush1.msra.mxu0 0.0
    %649 = vmatprep.subr.mxu0 0.0
    %650 = vmatpush1.msra.mxu0 0.0
    %651 = vmatprep.subr.mxu0 0.0
    %652 = vmatpush1.msra.mxu0 0.0
    %653 = vmatprep.subr.mxu0 0.0
    %654 = vmatpush1.msra.mxu0 0.0
    %655 = vmatprep.subr.mxu0 0.0
    %656 = vmatpush1.msra.mxu0 0.0
    %657 = vmatprep.subr.mxu0 0.0
    %658 = vmatpush1.msra.mxu0 0.0
    %659 = vmatprep.subr.mxu0 0.0
    %660 = vmatpush1.msra.mxu0 0.0
    %661 = vmatprep.subr.mxu0 0.0
    %662 = vmatpush1.msra.mxu0 0.0
    %663 = vmatprep.subr.mxu0 0.0
    %664 = vmatpush1.msra.mxu0 0.0
    %665 = vmatprep.subr.mxu0 0.0
    %666 = vmatpush1.msra.mxu0 0.0
    %667 = vmatprep.subr.mxu0 0.0
    %668 = vmatpush1.msra.mxu0 0.0
    %669 = vmatprep.subr.mxu0 0.0
    %670 = vmatpush1.msra.mxu0 0.0
    %671 = vmatprep.subr.mxu0 0.0
    %672 = vmatpush1.msra.mxu0 0.0
    %673 = vmatprep.subr.mxu0 0.0
    %674 = vmatpush1.msra.mxu0 0.0
    %675 = vmatprep.subr.mxu0 0.0
    %676 = vmatpush1.msra.mxu0 0.0
    %677 = vmatprep.subr.mxu0 0.0
    %678 = vmatpush1.msra.mxu0 0.0
    %679 = vmatprep.mubr.f32.mxu0 0.0
    %680 = vmatmul.mubr.f32.gmra.mrb[0].mxu0 %v592
    %v681 = vpop.f32.mrb[0].mxu0
    %v682 = vadd.f32 0.0, %v681
    %v683 = vpop.f32.mrb[0].mxu0
    %684 = vmatprep.mubr.f32.mxu0 0.0
    %685 = vmatmul.mubr.f32.gmra.mrb[0].mxu0 %v595
    %v686 = vpop.f32.mrb[0].mxu0
    %v687 = vadd.f32 0.0, %v686
    %v688 = vpop.f32.mrb[0].mxu0
    %689 = vmatprep.mubr.f32.mxu0 0.0
    %690 = vmatmul.mubr.f32.gmra.mrb[0].mxu0 %v598
    %v691 = vpop.f32.mrb[0].mxu0
    %v692 = vadd.f32 0.0, %v691
    %v693 = vpop.f32.mrb[0].mxu0
    %694 = vmatprep.mubr.f32.mxu0 0.0
    %695 = vmatmul.mubr.f32.gmra.mrb[0].mxu0 %v601
    %v696 = vpop.f32.mrb[0].mxu0
    %v697 = vadd.f32 0.0, %v696
    %v698 = vpop.f32.mrb[0].mxu0
    %699 = vmatprep.mubr.f32.mxu0 0.0
    %700 = vmatmul.mubr.f32.gmra.mrb[0].mxu0 %v604
    %v701 = vpop.f32.mrb[0].mxu0
    %v702 = vadd.f32 0.0, %v701
    %v703 = vpop.f32.mrb[0].mxu0
    %704 = vmatprep.mubr.f32.mxu0 0.0
    %705 = vmatmul.mubr.f32.gmra.mrb[0].mxu0 %v607
    %v706 = vpop.f32.mrb[0].mxu0
    %v707 = vadd.f32 0.0, %v706
    %v708 = vpop.f32.mrb[0].mxu0
    %709 = vmatprep.mubr.f32.mxu0 0.0
    %710 = vmatmul.mubr.f32.gmra.mrb[0].mxu0 %v610
    %v711 = vpop.f32.mrb[0].mxu0
    %v712 = vadd.f32 0.0, %v711
    %v713 = vpop.f32.mrb[0].mxu0
    %714 = vmatprep.mubr.f32.mxu0 0.0
    %715 = vmatmul.mubr.f32.gmra.mrb[0].mxu0 %v613
    %v716 = vpop.f32.mrb[0].mxu0
    %v717 = vadd.f32 0.0, %v716
    %v718 = vpop.f32.mrb[0].mxu0
    %719 = vdwg.mxu0
    %v720 = vadd.f32 %v682, %v692
    %v721 = vadd.f32 %v687, %v697
    %v722 = vadd.f32 %v720, %v702
    %v723 = vadd.f32 %v721, %v707
    %v724 = vadd.f32 %v722, %v712
    %v725 = vadd.f32 %v723, %v717
    %v726 = vlaneseq
    %v727 = vshrl.u32 %v726, 7
    %v728 = vsub.s32 1, %v727
    %v729 = vrot.slane %v34, %v728
    %734 = vrot.lane.b32.xlu0 %v35, 32
    %v735 = vpop.permute.xlu0 %734
    %736 = vrot.lane.b32.xlu0 %v36, 32
    %v737 = vpop.permute.xlu0 %736
    %738 = vrot.lane.b32.xlu0 %v37, 32
    %v739 = vpop.permute.xlu0 %738
    %740 = vrot.lane.b32.xlu0 %v38, 32
    %v741 = vpop.permute.xlu0 %740
    %v747 = vsel %vm43, %v724, 0
    %v750 = vsel %vm43, %v725, 0
    %752 = vmatprep.subr.mxu0 0.0
    %753 = vmatpush1.msra.mxu0 %v735
    %754 = vmatprep.subr.mxu0 0.0
    %755 = vmatpush1.msra.mxu0 %v737
    %756 = vmatprep.subr.mxu0 0.0
    %757 = vmatpush1.msra.mxu0 %v739
    %758 = vmatprep.subr.mxu0 0.0
    %759 = vmatpush1.msra.mxu0 %v741
    %760 = vmatprep.subr.mxu0 0.0
    %761 = vmatpush1.msra.mxu0 0.0
    %762 = vmatprep.subr.mxu0 0.0
    %763 = vmatpush1.msra.mxu0 0.0
    %764 = vmatprep.subr.mxu0 0.0
    %765 = vmatpush1.msra.mxu0 0.0
    %766 = vmatprep.subr.mxu0 0.0
    %767 = vmatpush1.msra.mxu0 0.0
    %768 = vmatprep.subr.mxu0 0.0
    %769 = vmatpush1.msra.mxu0 0.0
    %770 = vmatprep.subr.mxu0 0.0
    %771 = vmatpush1.msra.mxu0 0.0
    %772 = vmatprep.subr.mxu0 0.0
    %773 = vmatpush1.msra.mxu0 0.0
    %774 = vmatprep.subr.mxu0 0.0
    %775 = vmatpush1.msra.mxu0 0.0
    %776 = vmatprep.subr.mxu0 0.0
    %777 = vmatpush1.msra.mxu0 0.0
    %778 = vmatprep.subr.mxu0 0.0
    %779 = vmatpush1.msra.mxu0 0.0
    %780 = vmatprep.subr.mxu0 0.0
    %781 = vmatpush1.msra.mxu0 0.0
    %782 = vmatprep.subr.mxu0 0.0
    %783 = vmatpush1.msra.mxu0 0.0
    %784 = vmatprep.subr.mxu0 0.0
    %785 = vmatpush1.msra.mxu0 0.0
    %786 = vmatprep.subr.mxu0 0.0
    %787 = vmatpush1.msra.mxu0 0.0
    %788 = vmatprep.subr.mxu0 0.0
    %789 = vmatpush1.msra.mxu0 0.0
    %790 = vmatprep.subr.mxu0 0.0
    %791 = vmatpush1.msra.mxu0 0.0
    %792 = vmatprep.subr.mxu0 0.0
    %793 = vmatpush1.msra.mxu0 0.0
    %794 = vmatprep.subr.mxu0 0.0
    %795 = vmatpush1.msra.mxu0 0.0
    %796 = vmatprep.subr.mxu0 0.0
    %797 = vmatpush1.msra.mxu0 0.0
    %798 = vmatprep.subr.mxu0 0.0
    %799 = vmatpush1.msra.mxu0 0.0
    %800 = vmatprep.subr.mxu0 0.0
    %801 = vmatpush1.msra.mxu0 0.0
    %802 = vmatprep.subr.mxu0 0.0
    %803 = vmatpush1.msra.mxu0 0.0
    %804 = vmatprep.subr.mxu0 0.0
    %805 = vmatpush1.msra.mxu0 0.0
    %806 = vmatprep.subr.mxu0 0.0
    %807 = vmatpush1.msra.mxu0 0.0
    %808 = vmatprep.subr.mxu0 0.0
    %809 = vmatpush1.msra.mxu0 0.0
    %810 = vmatprep.subr.mxu0 0.0
    %811 = vmatpush1.msra.mxu0 0.0
    %812 = vmatprep.subr.mxu0 0.0
    %813 = vmatpush1.msra.mxu0 0.0
    %814 = vmatprep.subr.mxu0 0.0
    %815 = vmatpush1.msra.mxu0 0.0
    %816 = vmatprep.mubr.f32.mxu0 0.0
    %817 = vmatmul.mubr.f32.gmra.mrb[0].mxu0 %v747
    %v818 = vpop.f32.mrb[0].mxu0
    %v819 = vadd.f32 %v729, %v818
    %v820 = vpop.f32.mrb[0].mxu0
    %821 = vmatprep.mubr.f32.mxu0 0.0
    %822 = vmatmul.mubr.f32.gmra.mrb[0].mxu0 %v750
    %v823 = vpop.f32.mrb[0].mxu0
    %v824 = vadd.f32 %v729, %v823
    %v825 = vpop.f32.mrb[0].mxu0
    %826 = vdwg.mxu0
    %v827 = vadd.f32 %v26, %v819
    %v828 = vadd.f32 %v27, %v824
    %v829 = vsel %vm43, %v827, 0.0
    %830 = vadd.xlane.f32.xlu0 %v829
    %v831 = vpop.xlane.xlu0 %830
    %v832 = vsel %vm43, %v828, 0.0
    %833 = vadd.xlane.f32.xlu0 %v832
    %v834 = vpop.xlane.xlu0 %833
    %v835 = vrcp.pop 32.0
    %v836 = vmul.f32 %v831, %v835
    %v837 = vmul.f32 %v834, %v835
    %v838 = vmul.f32 %v827, %v827
    %v839 = vmul.f32 %v828, %v828
    %v840 = vsel %vm43, %v838, 0.0
    %841 = vadd.xlane.f32.xlu0 %v840
    %v842 = vpop.xlane.xlu0 %841
    %v843 = vsel %vm43, %v839, 0.0
    %844 = vadd.xlane.f32.xlu0 %v843
    %v845 = vpop.xlane.xlu0 %844
    %v846 = vmul.f32 %v842, %v835
    %v847 = vmul.f32 %v845, %v835
    %v848 = vmul.f32 %v836, %v836
    %v849 = vmul.f32 %v837, %v837
    %v850 = vsub.f32 %v846, %v848
    %v851 = vsub.f32 %v847, %v849
    %v852 = vsub.f32 %v827, %v836
    %v853 = vsub.f32 %v828, %v837
    %v854 = vadd.f32 %v850, 1e-05
    %v855 = vadd.f32 %v851, 1e-05
    %v856 = vrsqrt.pop %v854
    %v857 = vrsqrt.pop %v855
    %v858 = vmul.f32 %v852, %v856
    %v859 = vmul.f32 %v853, %v857
    %v860 = vlaneseq
    %v861 = vshrl.u32 %v860, 7
    %v862 = vsub.s32 2, %v861
    %v863 = vrot.slane %v34, %v862
    %v864 = vmul.f32 %v858, %v863
    %v865 = vmul.f32 %v859, %v863
    %v866 = vlaneseq
    %v867 = vshrl.u32 %v866, 7
    %v868 = vsub.s32 3, %v867
    %v869 = vrot.slane %v34, %v868
    %v870 = vadd.f32 %v864, %v869
    %v871 = vadd.f32 %v865, %v869
    %v872 = vld [vmem:[#allocation2 + $0x20] sm:$0xff]
    %v873 = vld [vmem:[#allocation2 + $0x28] sm:$0xff]
    %v874 = vld [vmem:[#allocation2 + $0x30] sm:$0xff]
    %v875 = vld [vmem:[#allocation2 + $0x38] sm:$0xff]
    %v876 = vlaneseq
    %v877 = vshrl.u32 %v876, 7
    %v878 = vsub.s32 4, %v877
    %v879 = vrot.slane %v34, %v878
    %v881 = vsel %vm43, %v870, 0
    %v884 = vsel %vm43, %v871, 0
    %886 = vmatprep.subr.mxu0 0.0
    %887 = vmatpush1.msra.mxu0 %v872
    %888 = vmatprep.subr.mxu0 0.0
    %889 = vmatpush1.msra.mxu0 %v873
    %890 = vmatprep.subr.mxu0 0.0
    %891 = vmatpush1.msra.mxu0 %v874
    %892 = vmatprep.subr.mxu0 0.0
    %893 = vmatpush1.msra.mxu0 %v875
    %894 = vmatprep.subr.mxu0 0.0
    %895 = vmatpush1.msra.mxu0 0.0
    %896 = vmatprep.subr.mxu0 0.0
    %897 = vmatpush1.msra.mxu0 0.0
    %898 = vmatprep.subr.mxu0 0.0
    %899 = vmatpush1.msra.mxu0 0.0
    %900 = vmatprep.subr.mxu0 0.0
    %901 = vmatpush1.msra.mxu0 0.0
    %902 = vmatprep.subr.mxu0 0.0
    %903 = vmatpush1.msra.mxu0 0.0
    %904 = vmatprep.subr.mxu0 0.0
    %905 = vmatpush1.msra.mxu0 0.0
    %906 = vmatprep.subr.mxu0 0.0
    %907 = vmatpush1.msra.mxu0 0.0
    %908 = vmatprep.subr.mxu0 0.0
    %909 = vmatpush1.msra.mxu0 0.0
    %910 = vmatprep.subr.mxu0 0.0
    %911 = vmatpush1.msra.mxu0 0.0
    %912 = vmatprep.subr.mxu0 0.0
    %913 = vmatpush1.msra.mxu0 0.0
    %914 = vmatprep.subr.mxu0 0.0
    %915 = vmatpush1.msra.mxu0 0.0
    %916 = vmatprep.subr.mxu0 0.0
    %917 = vmatpush1.msra.mxu0 0.0
    %918 = vmatprep.subr.mxu0 0.0
    %919 = vmatpush1.msra.mxu0 0.0
    %920 = vmatprep.subr.mxu0 0.0
    %921 = vmatpush1.msra.mxu0 0.0
    %922 = vmatprep.subr.mxu0 0.0
    %923 = vmatpush1.msra.mxu0 0.0
    %924 = vmatprep.subr.mxu0 0.0
    %925 = vmatpush1.msra.mxu0 0.0
    %926 = vmatprep.subr.mxu0 0.0
    %927 = vmatpush1.msra.mxu0 0.0
    %928 = vmatprep.subr.mxu0 0.0
    %929 = vmatpush1.msra.mxu0 0.0
    %930 = vmatprep.subr.mxu0 0.0
    %931 = vmatpush1.msra.mxu0 0.0
    %932 = vmatprep.subr.mxu0 0.0
    %933 = vmatpush1.msra.mxu0 0.0
    %934 = vmatprep.subr.mxu0 0.0
    %935 = vmatpush1.msra.mxu0 0.0
    %936 = vmatprep.subr.mxu0 0.0
    %937 = vmatpush1.msra.mxu0 0.0
    %938 = vmatprep.subr.mxu0 0.0
    %939 = vmatpush1.msra.mxu0 0.0
    %940 = vmatprep.subr.mxu0 0.0
    %941 = vmatpush1.msra.mxu0 0.0
    %942 = vmatprep.subr.mxu0 0.0
    %943 = vmatpush1.msra.mxu0 0.0
    %944 = vmatprep.subr.mxu0 0.0
    %945 = vmatpush1.msra.mxu0 0.0
    %946 = vmatprep.subr.mxu0 0.0
    %947 = vmatpush1.msra.mxu0 0.0
    %948 = vmatprep.subr.mxu0 0.0
    %949 = vmatpush1.msra.mxu0 0.0
    %950 = vmatprep.mubr.f32.mxu0 0.0
    %951 = vmatmul.mubr.f32.gmra.mrb[0].mxu0 %v881
    %v952 = vpop.f32.mrb[0].mxu0
    %v953 = vadd.f32 %v879, %v952
    %v954 = vpop.f32.mrb[0].mxu0
    %955 = vmatprep.mubr.f32.mxu0 0.0
    %956 = vmatmul.mubr.f32.gmra.mrb[0].mxu0 %v884
    %v957 = vpop.f32.mrb[0].mxu0
    %v958 = vadd.f32 %v879, %v957
    %v959 = vpop.f32.mrb[0].mxu0
    %960 = vdwg.mxu0
    %v961 = vmax.f32 %v953, 0.0
    %v962 = vmax.f32 %v958, 0.0
    %v963 = vld [vmem:[#allocation2 + $0x40] sm:$0xff]
    %v964 = vld [vmem:[#allocation2 + $0x48] sm:$0xff]
    %v965 = vld [vmem:[#allocation2 + $0x50] sm:$0xff]
    %v966 = vld [vmem:[#allocation2 + $0x58] sm:$0xff]
    %v967 = vld [vmem:[#allocation2 + $0x60] sm:$0xff]
    %v968 = vld [vmem:[#allocation2 + $0x68] sm:$0xff]
    %v969 = vld [vmem:[#allocation2 + $0x70] sm:$0xff]
    %v970 = vld [vmem:[#allocation2 + $0x78] sm:$0xff]
    %v971 = vlaneseq
    %v972 = vshrl.u32 %v971, 7
    %v973 = vsub.s32 5, %v972
    %v974 = vrot.slane %v34, %v973
    %v976 = vsel %vm446, %v961, 0
    %v979 = vsel %vm446, %v962, 0
    %981 = vmatprep.subr.mxu0 0.0
    %982 = vmatpush1.msra.mxu0 %v963
    %983 = vmatprep.subr.mxu0 0.0
    %984 = vmatpush1.msra.mxu0 %v964
    %985 = vmatprep.subr.mxu0 0.0
    %986 = vmatpush1.msra.mxu0 %v965
    %987 = vmatprep.subr.mxu0 0.0
    %988 = vmatpush1.msra.mxu0 %v966
    %989 = vmatprep.subr.mxu0 0.0
    %990 = vmatpush1.msra.mxu0 %v967
    %991 = vmatprep.subr.mxu0 0.0
    %992 = vmatpush1.msra.mxu0 %v968
    %993 = vmatprep.subr.mxu0 0.0
    %994 = vmatpush1.msra.mxu0 %v969
    %995 = vmatprep.subr.mxu0 0.0
    %996 = vmatpush1.msra.mxu0 %v970
    %997 = vmatprep.subr.mxu0 0.0
    %998 = vmatpush1.msra.mxu0 0.0
    %999 = vmatprep.subr.mxu0 0.0
    %1000 = vmatpush1.msra.mxu0 0.0
    %1001 = vmatprep.subr.mxu0 0.0
    %1002 = vmatpush1.msra.mxu0 0.0
    %1003 = vmatprep.subr.mxu0 0.0
    %1004 = vmatpush1.msra.mxu0 0.0
    %1005 = vmatprep.subr.mxu0 0.0
    %1006 = vmatpush1.msra.mxu0 0.0
    %1007 = vmatprep.subr.mxu0 0.0
    %1008 = vmatpush1.msra.mxu0 0.0
    %1009 = vmatprep.subr.mxu0 0.0
    %1010 = vmatpush1.msra.mxu0 0.0
    %1011 = vmatprep.subr.mxu0 0.0
    %1012 = vmatpush1.msra.mxu0 0.0
    %1013 = vmatprep.subr.mxu0 0.0
    %1014 = vmatpush1.msra.mxu0 0.0
    %1015 = vmatprep.subr.mxu0 0.0
    %1016 = vmatpush1.msra.mxu0 0.0
    %1017 = vmatprep.subr.mxu0 0.0
    %1018 = vmatpush1.msra.mxu0 0.0
    %1019 = vmatprep.subr.mxu0 0.0
    %1020 = vmatpush1.msra.mxu0 0.0
    %1021 = vmatprep.subr.mxu0 0.0
    %1022 = vmatpush1.msra.mxu0 0.0
    %1023 = vmatprep.subr.mxu0 0.0
    %1024 = vmatpush1.msra.mxu0 0.0
    %1025 = vmatprep.subr.mxu0 0.0
    %1026 = vmatpush1.msra.mxu0 0.0
    %1027 = vmatprep.subr.mxu0 0.0
    %1028 = vmatpush1.msra.mxu0 0.0
    %1029 = vmatprep.subr.mxu0 0.0
    %1030 = vmatpush1.msra.mxu0 0.0
    %1031 = vmatprep.subr.mxu0 0.0
    %1032 = vmatpush1.msra.mxu0 0.0
    %1033 = vmatprep.subr.mxu0 0.0
    %1034 = vmatpush1.msra.mxu0 0.0
    %1035 = vmatprep.subr.mxu0 0.0
    %1036 = vmatpush1.msra.mxu0 0.0
    %1037 = vmatprep.subr.mxu0 0.0
    %1038 = vmatpush1.msra.mxu0 0.0
    %1039 = vmatprep.subr.mxu0 0.0
    %1040 = vmatpush1.msra.mxu0 0.0
    %1041 = vmatprep.subr.mxu0 0.0
    %1042 = vmatpush1.msra.mxu0 0.0
    %1043 = vmatprep.subr.mxu0 0.0
    %1044 = vmatpush1.msra.mxu0 0.0
    %1045 = vmatprep.mubr.f32.mxu0 0.0
    %1046 = vmatmul.mubr.f32.gmra.mrb[0].mxu0 %v976
    %v1047 = vpop.f32.mrb[0].mxu0
    %v1048 = vadd.f32 %v974, %v1047
    %v1049 = vpop.f32.mrb[0].mxu0
    %1050 = vmatprep.mubr.f32.mxu0 0.0
    %1051 = vmatmul.mubr.f32.gmra.mrb[0].mxu0 %v979
    %v1052 = vpop.f32.mrb[0].mxu0
    %v1053 = vadd.f32 %v974, %v1052
    %v1054 = vpop.f32.mrb[0].mxu0
    %1055 = vdwg.mxu0
    %v1056 = vadd.f32 %v870, %v1048
    %v1057 = vadd.f32 %v871, %v1053
    %v1058 = vsel %vm43, %v1056, 0.0
    %1059 = vadd.xlane.f32.xlu0 %v1058
    %v1060 = vpop.xlane.xlu0 %1059
    %v1061 = vsel %vm43, %v1057, 0.0
    %1062 = vadd.xlane.f32.xlu0 %v1061
    %v1063 = vpop.xlane.xlu0 %1062
    %v1064 = vmul.f32 %v1060, %v835
    %v1065 = vmul.f32 %v1063, %v835
    %v1066 = vmul.f32 %v1056, %v1056
    %v1067 = vmul.f32 %v1057, %v1057
    %v1068 = vsel %vm43, %v1066, 0.0
    %1069 = vadd.xlane.f32.xlu0 %v1068
    %v1070 = vpop.xlane.xlu0 %1069
    %v1071 = vsel %vm43, %v1067, 0.0
    %1072 = vadd.xlane.f32.xlu0 %v1071
    %v1073 = vpop.xlane.xlu0 %1072
    %v1074 = vmul.f32 %v1070, %v835
    %v1075 = vmul.f32 %v1073, %v835
    %v1076 = vmul.f32 %v1064, %v1064
    %v1077 = vmul.f32 %v1065, %v1065
    %v1078 = vsub.f32 %v1074, %v1076
    %v1079 = vsub.f32 %v1075, %v1077
    %v1080 = vsub.f32 %v1056, %v1064
    %v1081 = vsub.f32 %v1057, %v1065
    %v1082 = vadd.f32 %v1078, 1e-05
    %v1083 = vadd.f32 %v1079, 1e-05
    %v1084 = vrsqrt.pop %v1082
    %v1085 = vrsqrt.pop %v1083
    %v1086 = vmul.f32 %v1080, %v1084
    %v1087 = vmul.f32 %v1081, %v1085
    %v1088 = vlaneseq
    %v1089 = vshrl.u32 %v1088, 7
    %v1090 = vsub.s32 6, %v1089
    %v1091 = vrot.slane %v34, %v1090
    %v1092 = vmul.f32 %v1086, %v1091
    %v1093 = vmul.f32 %v1087, %v1091
    %v1094 = vlaneseq
    %v1095 = vshrl.u32 %v1094, 7
    %v1096 = vsub.s32 7, %v1095
    %v1097 = vrot.slane %v34, %v1096
    %v1098 = vadd.f32 %v1092, %v1097
    %v1099 = vadd.f32 %v1093, %v1097
    %v1100 = vsel %vm43, %v1098, 0.0
    %v1101 = vsel %vm43, %v1099, 0.0
    %1102 = vst [vmem:[#allocation5] sm:$0xff] %v1100
    %1103 = vst [vmem:[#allocation5 + $0x8] sm:$0xff] %v1101
    // Predicated region
    $region14: #{tpu_custom_call.1} parent=1 // pred_check
      _
    $region15: #{tpu_custom_call.1} parent=1 // pred_check_branch
      %1105 = sbr.rel (0) target = $region17
    $region16: #{tpu_custom_call.1} parent=1 // pred_region
      %s1107 = ssub.s32 256, 256
      %1108 = vsyncadd [#allocation4], %s1107
      %s1109 = sshll.u32 [#allocation5], 4
      %s1110 = int_to_ptr.vmem [resolvable:$true] %s1109
      %1115 = dma.vmem_to_hbm [thread:$0]  %s1110, 256, %s2, [#allocation4], 128, 128, 8
    $region17: #{tpu_custom_call.1} parent=1 // pred_fallthru
      _
    // Predicated region
    $region18: #{tpu_custom_call.1} parent=1 // pred_check
      _
    $region19: #{tpu_custom_call.1} parent=1 // pred_check_branch
      %1117 = sbr.rel (0) target = $region21
    $region20: #{tpu_custom_call.1} parent=1 // pred_region
      %1118 = dma.done [#allocation4], 256
    $region21: #{tpu_custom_call.1} parent=1 // pred_fallthru
      _
    %1119 = vsyncpa [#allocation3], 1
    %1120 = vsyncpa [#allocation4], 1

</llo_original>
